<compile_context>
chip_gen: v7x
topology: tpu7x:2x2x1
jax: 0.10.0
libtpu: 0.0.40
codegen_flags: <defaults>
</compile_context>

<pallas_src>
import functools

import jax
import jax.numpy as jnp
from jax import lax
from jax.experimental import pallas as pl
from jax.experimental.pallas import tpu as pltpu


def _round_up(x, m):
    return ((x + m - 1) // m) * m


def _pick_block(dim, want, *, min_blocks=2):
    """Pick a 128-aligned block size for `dim`, preferring >= min_blocks blocks."""
    dim_al = _round_up(max(dim, 128), 128)
    blk = min(_round_up(want, 128), dim_al)
    if min_blocks > 1 and dim_al > 128:
        max_blk = _round_up(-(-dim_al // min_blocks), 128)
        blk = min(blk, max_blk)
    nblk = -(-dim_al // blk)
    return blk, nblk, blk * nblk


# ---------------------------------------------------------------------------
# Pass 1: vertex -> edge aggregation (produces Xe transposed, channels-major)
#   XeT[c, e] = escale[e] * sum_n X[n, c] * H[n, e],  escale = degE / |e|
# Grid: (E_blocks, N_blocks); N is the reduction axis (last, "arbitrary").
# ---------------------------------------------------------------------------
def _xe_kernel(xt_ref, h_ref, escale_ref, xet_ref, acc_ref, *, xt_resident):
    k = pl.program_id(1)

    @pl.when(k == 0)
    def _init():
        acc_ref[...] = jnp.zeros_like(acc_ref)

    bn = h_ref.shape[0]
    if xt_resident:
        # Whole X^T lives in VMEM; slice the k-th N chunk (128-aligned start).
        xt = xt_ref[:, pl.ds(pl.multiple_of(k * bn, bn), bn)]
    else:
        xt = xt_ref[...]

    # bf16 x bf16 (C, bn) @ (bn, be) -> f32 (C, be); native NN MXU matmul.
    acc_ref[...] += jnp.dot(xt, h_ref[...], preferred_element_type=jnp.float32)

    @pl.when(k == pl.num_programs(1) - 1)
    def _finish():
        xet_ref[...] = (acc_ref[...] * escale_ref[...]).astype(xet_ref.dtype)


# ---------------------------------------------------------------------------
# Pass 2: edge -> vertex aggregation + residual mix + identity-mapped linear
#   acc[n, c] = sum_e H[n, e] * XeT[c, e]
#   Xi        = acc * ((1-alpha)*degV) + alpha * X0
#   out       = Xi @ W_eff,   W_eff = (1-beta)*I + beta*W.T
# Grid: (N_blocks, E_blocks); E is the reduction axis (last, "arbitrary").
# Accumulates directly into the f32 output ref (no scratch).
# ---------------------------------------------------------------------------
def _out_kernel(alpha_ref, h_ref, xet_ref, x0_ref, degv_ref, w_ref, o_ref,
                *, xet_resident):
    k = pl.program_id(1)

    @pl.when(k == 0)
    def _init():
        o_ref[...] = jnp.zeros_like(o_ref)

    be = h_ref.shape[1]
    if xet_resident:
        xet = xet_ref[:, pl.ds(pl.multiple_of(k * be, be), be)]
    else:
        xet = xet_ref[...]

    # bf16 x bf16 (bn, be) x (C, be) contracted over the edge (lane) axis
    # -> f32 (bn, C); "NT" dims = natively supported transposed-RHS matmul.
    o_ref[...] += lax.dot_general(
        h_ref[...], xet,
        dimension_numbers=(((1,), (1,)), ((), ())),
        preferred_element_type=jnp.float32)

    @pl.when(k == pl.num_programs(1) - 1)
    def _finish():
        alpha = alpha_ref[0]
        # degv_ref already carries the (1 - alpha) * degV fold.
        xi = o_ref[...] * degv_ref[...] + alpha * x0_ref[...]
        # w_ref is W_eff = (1 - beta) * I + beta * W.T; small f32 matmul kept
        # in f32 for accuracy (O(bn*C^2), negligible vs. the aggregations).
        o_ref[...] = jnp.dot(xi, w_ref[...], preferred_element_type=jnp.float32)


def unigcnii_forward(H, X, X0, degE, degV, W, alpha, beta,
                     block_n=512, block_e=512,
                     resident_limit_bytes=8 * 1024 * 1024):
    """HyperGsysUniGCNII forward.  Glue/folding in JAX, hot path in Pallas."""
    N, E = H.shape
    C_in = X.shape[1]
    C_out = W.shape[0]
    assert W.shape == (C_out, C_in) and C_in == C_out, (
        "UniGCNII identity mapping requires a square weight")

    f32 = jnp.float32
    bf16 = jnp.bfloat16
    alpha = jnp.asarray(alpha, f32)
    beta = jnp.asarray(beta, f32)

    # Lane-dense channel padding; tile-aligned vertex/edge padding with >=2
    # blocks on each (future-)parallel axis when the dims allow (megacore).
    C_pad = _round_up(max(C_in, 128), 128)
    blk_n, grid_n, N_pad = _pick_block(N, block_n, min_blocks=2)
    blk_e, grid_e, E_pad = _pick_block(E, block_e, min_blocks=2)

    # Stationary-operand residency decision (budgeted against v7x 64 MiB,
    # double-buffered by the pipeline -> 2x the array size in VMEM).
    xt_resident = (C_pad * N_pad * 2) <= resident_limit_bytes
    xet_resident = (C_pad * E_pad * 2) <= resident_limit_bytes

    # --- small wrapper-side folds: O(E), O(N), O(C^2) ----------------------
    # NOTE: edge_size from H matches scatter-mean only for a 0/1 incidence H.
    edge_size = jnp.maximum(jnp.sum(H.astype(f32), axis=0), 1.0)        # (E,)
    escale = (degE.astype(f32) / edge_size).reshape(1, E)               # mean * degE
    degv_scaled = ((1.0 - alpha) * degV.astype(f32)).reshape(N, 1)      # (1-a)*degV
    w_eff = (1.0 - beta) * jnp.eye(C_in, dtype=f32) + beta * W.astype(f32).T

    # --- padding + dtype plumbing (layout work only) -----------------------
    H_p = jnp.pad(H.astype(bf16), ((0, N_pad - N), (0, E_pad - E)))     # 0/1 exact
    XT_p = jnp.pad(X.astype(bf16).T, ((0, C_pad - C_in), (0, N_pad - N)))
    X0_p = jnp.pad(X0.astype(f32), ((0, N_pad - N), (0, C_pad - C_in)))
    escale_p = jnp.pad(escale, ((0, 0), (0, E_pad - E)))
    degv_p = jnp.pad(degv_scaled, ((0, N_pad - N), (0, 0)))
    w_p = jnp.pad(w_eff, ((0, C_pad - C_in), (0, C_pad - C_in)))
    alpha_arr = alpha.reshape(1)

    cparams = pltpu.CompilerParams(
        dimension_semantics=("parallel", "arbitrary"),
        vmem_limit_bytes=48 * 1024 * 1024)

    # ------------------ pass 1: XeT = degE/|e| * (X^T H) -------------------
    if xt_resident:
        xt_spec = pl.BlockSpec((C_pad, N_pad), lambda i, k: (0, 0))
        xt_reads = 1
    else:
        xt_spec = pl.BlockSpec((C_pad, blk_n), lambda i, k: (0, k))
        xt_reads = grid_e
    xe_cost = pl.CostEstimate(
        flops=2 * N_pad * E_pad * C_pad,
        transcendentals=0,
        bytes_accessed=(N_pad * E_pad * 2 + xt_reads * N_pad * C_pad * 2
                        + E_pad * C_pad * 2 + E_pad * 4))
    xet = pl.pallas_call(
        functools.partial(_xe_kernel, xt_resident=xt_resident),
        out_shape=jax.ShapeDtypeStruct((C_pad, E_pad), bf16),
        grid_spec=pltpu.PrefetchScalarGridSpec(
            num_scalar_prefetch=0,
            grid=(grid_e, grid_n),
            in_specs=[
                xt_spec,                                                # X^T
                pl.BlockSpec((blk_n, blk_e), lambda i, k: (k, i)),      # H
                pl.BlockSpec((1, blk_e), lambda i, k: (0, i)),          # escale
            ],
            out_specs=pl.BlockSpec((C_pad, blk_e), lambda i, k: (0, i)),
            scratch_shapes=[pltpu.VMEM((C_pad, blk_e), f32)]),
        compiler_params=cparams,
        cost_estimate=xe_cost,
    )(XT_p, H_p, escale_p)

    # --------- pass 2: out = ((H Xe) * degv' + alpha*X0) @ W_eff -----------
    if xet_resident:
        xet_spec = pl.BlockSpec((C_pad, E_pad), lambda i, k: (0, 0))
        xet_reads = 1
    else:
        xet_spec = pl.BlockSpec((C_pad, blk_e), lambda i, k: (0, k))
        xet_reads = grid_n
    out_cost = pl.CostEstimate(
        flops=2 * N_pad * E_pad * C_pad + 2 * N_pad * C_pad * C_pad,
        transcendentals=0,
        bytes_accessed=(N_pad * E_pad * 2 + xet_reads * E_pad * C_pad * 2
                        + 2 * N_pad * C_pad * 4 + C_pad * C_pad * 4 + N_pad * 4))
    out_p = pl.pallas_call(
        functools.partial(_out_kernel, xet_resident=xet_resident),
        out_shape=jax.ShapeDtypeStruct((N_pad, C_pad), f32),
        grid_spec=pltpu.PrefetchScalarGridSpec(
            num_scalar_prefetch=0,
            grid=(grid_n, grid_e),
            in_specs=[
                pl.BlockSpec(memory_space=pltpu.MemorySpace.SMEM),      # alpha
                pl.BlockSpec((blk_n, blk_e), lambda i, k: (i, k)),      # H
                xet_spec,                                               # XeT
                pl.BlockSpec((blk_n, C_pad), lambda i, k: (i, 0)),      # X0
                pl.BlockSpec((blk_n, 1), lambda i, k: (i, 0)),          # degv'
                pl.BlockSpec((C_pad, C_pad), lambda i, k: (0, 0)),      # W_eff
            ],
            out_specs=pl.BlockSpec((blk_n, C_pad), lambda i, k: (i, 0))),
        compiler_params=cparams,
        cost_estimate=out_cost,
    )(alpha_arr, H_p, xet, X0_p, degv_p, w_p)

    return out_p[:N, :C_out]


def unigcnii_reference(H, X, X0, degE, degV, W, alpha, beta):
    """Pure-JAX f32 reference of the same math, for verification."""
    edge_size = jnp.maximum(jnp.sum(H, axis=0, keepdims=True).T, 1.0)
    Xe = (H.T @ X) / edge_size * degE.reshape(-1, 1)
    Xv = (H @ Xe) * degV.reshape(-1, 1)
    Xi = (1.0 - alpha) * Xv + alpha * X0
    return (1.0 - beta) * Xi + beta * (Xi @ W.T)


if __name__ == "__main__":
    key = jax.random.PRNGKey(0)
    k_h, k_x, k_x0, k_w = jax.random.split(key, 4)

    N = 300   # number of vertices
    E = 200   # number of hyperedges
    C = 48    # in_channels == out_channels (UniGCNII uses a square W)

    # Deterministic dense 0/1 incidence matrix; every edge has >=1 vertex.
    H = (jax.random.uniform(k_h, (N, E)) < 0.15).astype(jnp.float32)
    H = H.at[jnp.arange(E) % N, jnp.arange(E)].set(1.0)

    # Degree-based normalizers (as hyperg.degE / hyperg.degV would supply).
    degv_raw = jnp.maximum(jnp.sum(H, axis=1), 1.0)                     # (N,)
    degV = degv_raw ** -0.5                                             # (N,)
    edge_size = jnp.maximum(jnp.sum(H, axis=0), 1.0)                    # (E,)
    degE = ((H.T @ degv_raw) / edge_size) ** -0.5                       # (E,)

    X = jax.random.normal(k_x, (N, C), dtype=jnp.float32)
    X0 = jax.random.normal(k_x0, (N, C), dtype=jnp.float32)
    W = jax.random.normal(k_w, (C, C), dtype=jnp.float32) * (1.0 / jnp.sqrt(C))

    alpha = 0.1
    beta = 0.5

    ref = unigcnii_reference(H, X, X0, degE, degV, W, alpha, beta)

    # Resident-stationary path (default; tiny arrays fit easily in VMEM).
    out_res = unigcnii_forward(H, X, X0, degE, degV, W, alpha, beta)
    out_res = jax.block_until_ready(out_res)
    assert out_res.shape == (N, C)
    assert bool(jnp.allclose(out_res, ref, atol=1e-2, rtol=1e-2)), \
        "mismatch vs reference (resident path)"

    # Streaming path (force it by disabling residency) to exercise the
    # block-streamed stationary operand as well.
    out_str = unigcnii_forward(H, X, X0, degE, degV, W, alpha, beta,
                               resident_limit_bytes=0)
    out_str = jax.block_until_ready(out_str)
    assert bool(jnp.allclose(out_str, ref, atol=1e-2, rtol=1e-2)), \
        "mismatch vs reference (streaming path)"

    print("KERNEL_OK")
</pallas_src>

<mosaic_0001>
module attributes {stable_mosaic.version = 11 : i64} {
  func.func @_xe_kernel(%arg0: i32, %arg1: i32, %arg2: memref<128x512xbf16, #tpu.memory_space<vmem>>, %arg3: memref<256x128xbf16, #tpu.memory_space<vmem>>, %arg4: memref<1x128xf32, #tpu.memory_space<vmem>>, %arg5: memref<128x128xbf16, #tpu.memory_space<vmem>>, %arg6: memref<128x128xf32, #tpu.memory_space<vmem>>) attributes {dimension_semantics = [#tpu.dimension_semantics<parallel>, #tpu.dimension_semantics<arbitrary>], iteration_bounds = array<i64: 2, 2>, scalar_prefetch = 0 : i64, scratch_operands = 1 : i64, tpu.core_type = #tpu.core_type<tc>, window_params = [{pipeline_mode = #tpu.pipeline_mode<synchronous>, transform_indices = @transform_0, window_bounds = array<i64: 128, 512>}, {transform_indices = @transform_1, window_bounds = array<i64: 256, 128>}, {transform_indices = @transform_2, window_bounds = array<i64: 1, 128>}, {transform_indices = @transform_3, window_bounds = array<i64: 128, 128>}]} {
    %c0_i32 = arith.constant 0 : i32
    %0 = arith.cmpi eq, %arg1, %c0_i32 : i32
    %1 = arith.extui %0 : i1 to i32
    %c0_i32_0 = arith.constant 0 : i32
    %2 = arith.cmpi ne, %1, %c0_i32_0 : i32
    scf.if %2 {
      %cst_8 = arith.constant 0.000000e+00 : f32
      %15 = vector.broadcast %cst_8 : f32 to vector<128x128xf32>
      %c0_9 = arith.constant 0 : index
      %c0_10 = arith.constant 0 : index
      %16 = vector.load %arg6[%c0_9, %c0_10] : memref<128x128xf32, #tpu.memory_space<vmem>>, vector<128x128xf32>
      tpu.vector_store %arg6[%c0_9, %c0_10], %15 {strides = array<i32>} : memref<128x128xf32, #tpu.memory_space<vmem>>, vector<128x128xf32>,
    } else {
    }
    %c256_i32 = arith.constant 256 : i32
    %3 = arith.muli %arg1, %c256_i32 : i32
    %4 = tpu.assume_multiple %3, 256 : i32
    %c0 = arith.constant 0 : index
    %5 = arith.index_cast %4 : i32 to index
    %6 = vector.load %arg2[%c0, %5] : memref<128x512xbf16, #tpu.memory_space<vmem>>, vector<128x256xbf16>
    %c0_1 = arith.constant 0 : index
    %c0_2 = arith.constant 0 : index
    %7 = vector.load %arg6[%c0_1, %c0_2] : memref<128x128xf32, #tpu.memory_space<vmem>>, vector<128x128xf32>
    %c0_3 = arith.constant 0 : index
    %c0_4 = arith.constant 0 : index
    %8 = vector.load %arg3[%c0_3, %c0_4] : memref<256x128xbf16, #tpu.memory_space<vmem>>, vector<256x128xbf16>
    %cst = arith.constant dense<0.000000e+00> : vector<128x128xf32>
    %9 = tpu.matmul %6, %8, %cst {dimension_numbers = #tpu.dot_dimension_numbers<[1], [0], [0], [1], [0, 0, 1, 1], [], []>} : vector<128x256xbf16>, vector<256x128xbf16>, vector<128x128xf32> -> vector<128x128xf32>
    %10 = arith.addf %7, %9 : vector<128x128xf32>
    %c0_5 = arith.constant 0 : index
    %c0_6 = arith.constant 0 : index
    %11 = vector.load %arg6[%c0_5, %c0_6] : memref<128x128xf32, #tpu.memory_space<vmem>>, vector<128x128xf32>
    tpu.vector_store %arg6[%c0_5, %c0_6], %10 {strides = array<i32>} : memref<128x128xf32, #tpu.memory_space<vmem>>, vector<128x128xf32>,
    %c1_i32 = arith.constant 1 : i32
    %12 = arith.cmpi eq, %arg1, %c1_i32 : i32
    %13 = arith.extui %12 : i1 to i32
    %c0_i32_7 = arith.constant 0 : i32
    %14 = arith.cmpi ne, %13, %c0_i32_7 : i32
    scf.if %14 {
      %c0_8 = arith.constant 0 : index
      %c0_9 = arith.constant 0 : index
      %15 = vector.load %arg6[%c0_8, %c0_9] : memref<128x128xf32, #tpu.memory_space<vmem>>, vector<128x128xf32>
      %c0_10 = arith.constant 0 : index
      %c0_11 = arith.constant 0 : index
      %16 = vector.load %arg4[%c0_10, %c0_11] : memref<1x128xf32, #tpu.memory_space<vmem>>, vector<1x128xf32>
      %17 = vector.broadcast %16 : vector<1x128xf32> to vector<128x128xf32>
      %18 = arith.mulf %15, %17 : vector<128x128xf32>
      %19 = arith.truncf %18 : vector<128x128xf32> to vector<128x128xbf16>
      %c0_12 = arith.constant 0 : index
      %c0_13 = arith.constant 0 : index
      %20 = vector.load %arg5[%c0_12, %c0_13] : memref<128x128xbf16, #tpu.memory_space<vmem>>, vector<128x128xbf16>
      tpu.vector_store %arg5[%c0_12, %c0_13], %19 {strides = array<i32>} : memref<128x128xbf16, #tpu.memory_space<vmem>>, vector<128x128xbf16>,
    } else {
    }
    return
  }
  func.func @transform_0(%arg0: i32, %arg1: i32) -> (i32, i32) {
    %c0_i32 = arith.constant 0 : i32
    %c0_i32_0 = arith.constant 0 : i32
    %c0_i32_1 = arith.constant 0 : i32
    return %c0_i32, %c0_i32_0 : i32, i32
  }
  func.func @transform_1(%arg0: i32, %arg1: i32) -> (i32, i32) {
    %c0_i32 = arith.constant 0 : i32
    return %arg1, %arg0 : i32, i32
  }
  func.func @transform_2(%arg0: i32, %arg1: i32) -> (i32, i32) {
    %c0_i32 = arith.constant 0 : i32
    %c0_i32_0 = arith.constant 0 : i32
    return %c0_i32, %arg0 : i32, i32
  }
  func.func @transform_3(%arg0: i32, %arg1: i32) -> (i32, i32) {
    %c0_i32 = arith.constant 0 : i32
    %c0_i32_0 = arith.constant 0 : i32
    return %c0_i32, %arg0 : i32, i32
  }
}

</mosaic_0001>

<llo_original>
// kernel: tpu_custom_call.1
$region0: #{tpu_custom_call.1}
  #allocation0 [shape = 'u32[]', space=smem, size = 0x4, offset = 0x4, fixed_abs, tag = 'smem constant byte address 0x4 - core index']
  #allocation1 [shape = 'u32[144,128]{1,0:T(1,128)}', space=vmem, size = 0x12000, scoped, tag = 'internal scratch']
  #allocation2 [shape = 'f32[128,128]{1,0:T(8,128)}', space=vmem, size = 0x10000, scoped, tag = 'scratch operand']
  %s0 = inlined_call_operand.hbm [shape: bf16[128,512], index: 0, kind: input, shape index: {}]
  %s1 = inlined_call_operand.hbm [shape: bf16[512,256], index: 1, kind: input, shape index: {}]
  %s2 = inlined_call_operand.vmem [shape: f32[1,256], index: 2, kind: input, shape index: {}]
  %s3 = inlined_call_operand.hbm [shape: bf16[128,256], index: 3, kind: output, shape index: {}]
  %s4 = sld [smem:[#allocation0]]
  $region61: #{tpu_custom_call.1} parent=0
    _
  %s6 = ssub.s32 1, %s4
  %s7 = scalar_select 0, %s6, %s4
  $region1: #{tpu_custom_call.1} parent=0
    #allocation3 [shape = 'u8[131072]{0}', space=vmem, size = 0x20000, scoped, tag = 'input window, operand 0, single buffered']
    #allocation4 [shape = 's32[2]{0}', space=sflag, size = 0x8, scoped, tag = 'scoped memory for tpu_custom_call.1']
    #allocation5 [shape = 's32[2]{0}', space=sflag, size = 0x8, scoped, tag = 'scoped memory for tpu_custom_call.1']
    #allocation6 [shape = 'u8[131072]{0}', space=vmem, size = 0x20000, scoped, tag = 'input window, operand 1']
    #allocation7 [shape = 's32[2]{0}', space=sflag, size = 0x8, scoped, tag = 'scoped memory for tpu_custom_call.1']
    #allocation8 [shape = 'u8[65536]{0}', space=vmem, size = 0x10000, scoped, tag = 'output window, operand 0']
    %8 = vsyncpa [#allocation4], 0
    %9 = vsyncpa [#allocation7], 0
    %s10 = scalar_lea.sflag [#allocation7], 1
    %11 = vsyncpa %s10, 0
    %12 = vsyncpa [#allocation5], 0
    %s13 = scalar_lea.sflag [#allocation5], 1
    %14 = vsyncpa %s13, 0
    loop: start=0, step=1, limit=6
    $region2: #{tpu_custom_call.1} parent=1 // loop_pre_header
      _
    $region3: #{tpu_custom_call.1} parent=1 // loop_header
      %s16 = sphi 0, %s20
      %p17 = scmp.ge.s32.totalorder %s16, 6
      %s23 = sphi 0, %s35
      %s24 = sphi 0, %s31
      %s25 = sphi 0, %s23
      %s26 = sphi 0, %s24
      %s27 = sphi 0, %s25
      %s28 = sphi 0, %s26
      %s36 = sphi 0, %s36
      %s38 = sphi 0, %s36
      %s39 = sphi 0, %s38
      %s53 = sphi 0, %s39
      %s61 = sphi 0, %s63
      %s64 = sphi 0, %s61
      %s65 = sphi 0, %s64
      %s81 = sphi 0, %s65
      %s87 = sphi 0, %s89
      %s90 = sphi 0, %s87
      %s91 = sphi 0, %s90
      %s107 = sphi 0, %s91
      %s113 = sphi 0, %s115
      %s116 = sphi 0, %s113
      %s117 = sphi 0, %s116
      %s133 = sphi 0, %s117
    $region4: #{tpu_custom_call.1} parent=1 // loop_header_branch
      %19 = sbr.rel (%p17) target = $region8
    $region5: #{tpu_custom_call.1} parent=1 // loop_body
      %s21 = ssub.s32 %s16, 1
      %s22 = ssub.s32 %s16, 2
      %s29 = sadd.s32 1, %s24
      %p30 = scmp.ge.s32.totalorder %s29, 2
      %s31 = scalar_select %p30, 0, %s29
      %s32 = sadd.s32 1, %s23
      %s33 = scalar_select %p30, %s32, %s23
      %p34 = scmp.ge.s32.totalorder %s33, 2
      %s35 = scalar_select %p34, 0, %s33
      %s37 = sadd.s32 %s36, 1
      %p40 = scmp.eq.s32.totalorder %s16, 3
      %p41 = scmp.ne.s32.totalorder %s36, %s38
      %p42 = scmp.eq.s32.totalorder %s16, 0
      %p43 = por %p41, %p42
      %p44 = scmp.ne.s32.totalorder %s36, %s38
      %p45 = scmp.eq.s32.totalorder %s21, 3
      %p46 = por %p44, %p45
      %p47 = scmp.ne.s32.totalorder %s38, %s39
      %p48 = scmp.eq.s32.totalorder %s21, 0
      %p49 = por %p47, %p48
      %p50 = scmp.ne.s32.totalorder %s38, %s39
      %p51 = scmp.eq.s32.totalorder %s22, 3
      %p52 = por %p50, %p51
      %p54 = scmp.ne.s32.totalorder %s39, %s53
      %p55 = scmp.eq.s32.totalorder %s22, 0
      %p56 = por %p54, %p55
      %s57 = ssub.s32 %s24, %s31
      %s58 = ssub.s32 %s23, %s35
      %s59 = sor.u32 %s57, %s58
      %p60 = scmp.eq.s32.totalorder %s59, 0
      %s62 = sadd.s32 %s61, 1
      %s63 = scalar_select %p60, %s61, %s62
      %p66 = pneg %p60
      %p67 = scmp.eq.s32.totalorder %s16, 3
      %p68 = por %p66, %p67
      %p69 = scmp.ne.s32.totalorder %s61, %s64
      %p70 = scmp.eq.s32.totalorder %s16, 0
      %p71 = por %p69, %p70
      %p72 = scmp.ne.s32.totalorder %s61, %s64
      %p73 = scmp.eq.s32.totalorder %s21, 3
      %p74 = por %p72, %p73
      %p75 = scmp.ne.s32.totalorder %s64, %s65
      %p76 = scmp.eq.s32.totalorder %s21, 0
      %p77 = por %p75, %p76
      %p78 = scmp.ne.s32.totalorder %s64, %s65
      %p79 = scmp.eq.s32.totalorder %s22, 3
      %p80 = por %p78, %p79
      %p82 = scmp.ne.s32.totalorder %s65, %s81
      %p83 = scmp.eq.s32.totalorder %s22, 0
      %p84 = por %p82, %p83
      %s85 = ssub.s32 %s23, %s35
      %p86 = scmp.eq.s32.totalorder %s85, 0
      %s88 = sadd.s32 %s87, 1
      %s89 = scalar_select %p86, %s87, %s88
      %p92 = pneg %p86
      %p93 = scmp.eq.s32.totalorder %s16, 3
      %p94 = por %p92, %p93
      %p95 = scmp.ne.s32.totalorder %s87, %s90
      %p96 = scmp.eq.s32.totalorder %s16, 0
      %p97 = por %p95, %p96
      %p98 = scmp.ne.s32.totalorder %s87, %s90
      %p99 = scmp.eq.s32.totalorder %s21, 3
      %p100 = por %p98, %p99
      %p101 = scmp.ne.s32.totalorder %s90, %s91
      %p102 = scmp.eq.s32.totalorder %s21, 0
      %p103 = por %p101, %p102
      %p104 = scmp.ne.s32.totalorder %s90, %s91
      %p105 = scmp.eq.s32.totalorder %s22, 3
      %p106 = por %p104, %p105
      %p108 = scmp.ne.s32.totalorder %s91, %s107
      %p109 = scmp.eq.s32.totalorder %s22, 0
      %p110 = por %p108, %p109
      %s111 = ssub.s32 %s23, %s35
      %p112 = scmp.eq.s32.totalorder %s111, 0
      %s114 = sadd.s32 %s113, 1
      %s115 = scalar_select %p112, %s113, %s114
      %p118 = pneg %p112
      %p119 = scmp.eq.s32.totalorder %s16, 3
      %p120 = por %p118, %p119
      %p121 = scmp.ne.s32.totalorder %s113, %s116
      %p122 = scmp.eq.s32.totalorder %s16, 0
      %p123 = por %p121, %p122
      %p124 = scmp.ne.s32.totalorder %s113, %s116
      %p125 = scmp.eq.s32.totalorder %s21, 3
      %p126 = por %p124, %p125
      %p127 = scmp.ne.s32.totalorder %s116, %s117
      %p128 = scmp.eq.s32.totalorder %s21, 0
      %p129 = por %p127, %p128
      %p130 = scmp.ne.s32.totalorder %s116, %s117
      %p131 = scmp.eq.s32.totalorder %s22, 3
      %p132 = por %p130, %p131
      %p134 = scmp.ne.s32.totalorder %s117, %s133
      %p135 = scmp.eq.s32.totalorder %s22, 0
      %p136 = por %p134, %p135
      %p137 = scmp.le.s32.totalorder 1, %s16
      %p138 = scmp.lt.s32.totalorder %s16, 5
      %p139 = pnand %p137, %p138
      %p140 = pneg %p139
      // Predicated region
      $region9: #{tpu_custom_call.1} parent=5 // pred_check
        _
      $region10: #{tpu_custom_call.1} parent=5 // pred_check_branch
        %142 = sbr.rel (%p139) target = $region12
      $region11: #{tpu_custom_call.1} parent=5 // pred_region
        %s143 = ssub.s32 %s16, 1
        // Predicated region
        $region13: #{tpu_custom_call.1} parent=11 // pred_check
          %p144 = pneg %p49
        $region14: #{tpu_custom_call.1} parent=11 // pred_check_branch
          %146 = sbr.rel (%p144) target = $region16
        $region15: #{tpu_custom_call.1} parent=11 // pred_region
          %s148 = ssub.s32 4096, 4096
          %149 = vsyncadd [#allocation4], %s148
          %s150 = sshll.u32 [#allocation3], 4
          %s151 = int_to_ptr.vmem [resolvable:$true] %s150
          %156 = dma.hbm_to_vmem [thread:$0]  %s0, 4096, %s151, [#allocation4], 256, 256, 16
        $region16: #{tpu_custom_call.1} parent=11 // pred_fallthru
          _
      $region12: #{tpu_custom_call.1} parent=5 // pred_fallthru
        _
      %p157 = scmp.lt.s32.totalorder %s16, 4
      // Predicated region
      $region17: #{tpu_custom_call.1} parent=5 // pred_check
        %p158 = pneg %p157
      $region18: #{tpu_custom_call.1} parent=5 // pred_check_branch
        %160 = sbr.rel (%p158) target = $region20
      $region19: #{tpu_custom_call.1} parent=5 // pred_region
        // Predicated region
        $region21: #{tpu_custom_call.1} parent=19 // pred_check
          %p161 = pneg %p71
        $region22: #{tpu_custom_call.1} parent=19 // pred_check_branch
          %163 = sbr.rel (%p161) target = $region24
        $region23: #{tpu_custom_call.1} parent=19 // pred_region
          %s164 = sand.u32 %s61, 1
          %s165 = scalar_lea.sflag [#allocation7], %s164
          %s166 = sand.u32 %s61, 1
          %s167 = smul.addr %s166, 128
          %s168 = scalar_lea.vmem [#allocation6], %s167
          %s169 = smul.u32 32, %s24
          %s171 = ssub.s32 2048, 2048
          %172 = vsyncadd %s165, %s171
          %s173 = smul.addr %s169, 2
          %s174 = sadd.s32 %s23, %s173
          %s175 = smul.addr %s174, 64
          %s176 = scalar_lea.hbm %s1, %s175
          %s177 = sshll.u32 %s168, 4
          %s178 = int_to_ptr.vmem [resolvable:$true] %s177
          %183 = dma.hbm_to_vmem [thread:$0]  %s176, 2048, %s178, %s165, 128, 64, 4
        $region24: #{tpu_custom_call.1} parent=19 // pred_fallthru
          _
        // Predicated region
        $region25: #{tpu_custom_call.1} parent=19 // pred_check
          %p184 = pneg %p97
        $region26: #{tpu_custom_call.1} parent=19 // pred_check_branch
          %186 = sbr.rel (%p184) target = $region28
        $region27: #{tpu_custom_call.1} parent=19 // pred_region
          %p187 = scmp.lt.s32.totalorder %s23, 1
          %s188 = scalar_select %p187, %s23, 1
          %s189 = scalar_lea.vmem %s2, %s188
        $region28: #{tpu_custom_call.1} parent=19 // pred_fallthru
          _
      $region20: #{tpu_custom_call.1} parent=5 // pred_fallthru
        _
      %p190 = scmp.le.s32.totalorder 1, %s16
      %p191 = scmp.lt.s32.totalorder %s16, 5
      %p192 = pnand %p190, %p191
      %p193 = pneg %p192
      // Predicated region
      $region29: #{tpu_custom_call.1} parent=5 // pred_check
        _
      $region30: #{tpu_custom_call.1} parent=5 // pred_check_branch
        %195 = sbr.rel (%p192) target = $region32
      $region31: #{tpu_custom_call.1} parent=5 // pred_region
        %s196 = ssub.s32 %s16, 1
        // Predicated region
        $region33: #{tpu_custom_call.1} parent=31 // pred_check
          %p197 = pneg %p49
        $region34: #{tpu_custom_call.1} parent=31 // pred_check_branch
          %199 = sbr.rel (%p197) target = $region36
        $region35: #{tpu_custom_call.1} parent=31 // pred_region
          %200 = dma.done [#allocation4], 4096
        $region36: #{tpu_custom_call.1} parent=31 // pred_fallthru
          _
        %s201 = sand.u32 %s64, 1
        %s202 = scalar_lea.sflag [#allocation7], %s201
        %s203 = sand.u32 %s64, 1
        %s204 = smul.addr %s203, 128
        %s205 = scalar_lea.vmem [#allocation6], %s204
        // Predicated region
        $region37: #{tpu_custom_call.1} parent=31 // pred_check
          %p206 = pneg %p77
        $region38: #{tpu_custom_call.1} parent=31 // pred_check_branch
          %208 = sbr.rel (%p206) target = $region40
        $region39: #{tpu_custom_call.1} parent=31 // pred_region
          %209 = dma.done %s202, 2048
        $region40: #{tpu_custom_call.1} parent=31 // pred_fallthru
          _
        %p210 = pneg %p49
        %p211 = pneg %p46
        %s212 = sand.u32 %s64, 1
        %s213 = scalar_lea.sflag [#allocation7], %s212
        %s214 = sand.u32 %s64, 1
        %s215 = smul.addr %s214, 128
        %s216 = scalar_lea.vmem [#allocation6], %s215
        %p217 = pneg %p77
        %p218 = pneg %p74
        %p219 = scmp.lt.s32.totalorder %s25, 1
        %s220 = scalar_select %p219, %s25, 1
        %s221 = scalar_lea.vmem %s2, %s220
        %p222 = pneg %p103
        %p223 = pneg %p100
        %p224 = pneg %p129
        %p225 = pneg %p126
        %s226 = sand.u32 %s116, 1
        %s227 = scalar_lea.sflag [#allocation5], %s226
        %s228 = sand.u32 %s116, 1
        %s229 = smul.addr %s228, 64
        %s230 = scalar_lea.vmem [#allocation8], %s229
        %s231 = smul.u32 32, %s26
        %p232 = scmp.lt.s32.totalorder %s25, 1
        %s233 = scalar_select %p232, %s25, 1
        %s234 = scalar_lea.vmem %s2, %s233
        %p236 = scmp.eq.s32.totalorder %s26, 0
        // Predicated region
        $region41: #{tpu_custom_call.1} parent=31 // pred_check
          %p237 = pneg %p236
        $region42: #{tpu_custom_call.1} parent=31 // pred_check_branch
          %239 = sbr.rel (%p237) target = $region44
        $region43: #{tpu_custom_call.1} parent=31 // pred_region
          %240 = vst [vmem:[#allocation2] sm:$0xff] 0.0
          %241 = vst [vmem:[#allocation2 + $0x8] sm:$0xff] 0.0
          %242 = vst [vmem:[#allocation2 + $0x10] sm:$0xff] 0.0
          %243 = vst [vmem:[#allocation2 + $0x18] sm:$0xff] 0.0
          %244 = vst [vmem:[#allocation2 + $0x20] sm:$0xff] 0.0
          %245 = vst [vmem:[#allocation2 + $0x28] sm:$0xff] 0.0
          %246 = vst [vmem:[#allocation2 + $0x30] sm:$0xff] 0.0
          %247 = vst [vmem:[#allocation2 + $0x38] sm:$0xff] 0.0
          %248 = vst [vmem:[#allocation2 + $0x40] sm:$0xff] 0.0
          %249 = vst [vmem:[#allocation2 + $0x48] sm:$0xff] 0.0
          %250 = vst [vmem:[#allocation2 + $0x50] sm:$0xff] 0.0
          %251 = vst [vmem:[#allocation2 + $0x58] sm:$0xff] 0.0
          %252 = vst [vmem:[#allocation2 + $0x60] sm:$0xff] 0.0
          %253 = vst [vmem:[#allocation2 + $0x68] sm:$0xff] 0.0
          %254 = vst [vmem:[#allocation2 + $0x70] sm:$0xff] 0.0
          %255 = vst [vmem:[#allocation2 + $0x78] sm:$0xff] 0.0
        $region44: #{tpu_custom_call.1} parent=31 // pred_fallthru
          _
        %s256 = smul.u32 %s26, 256
        %s257 = sshra.s32 %s256, 7
        %s258 = sand.u32 %s256, 127
        %s259 = smul.addr %s257, 4
        %s260 = scalar_lea.vmem [#allocation3], %s259
        %v261 = vld [vmem:[%s260] sm:$0xff]
        %v262 = vld [vmem:[%s260 + $0x10] sm:$0xff]
        %v263 = vld [vmem:[%s260 + $0x20] sm:$0xff]
        %v264 = vld [vmem:[%s260 + $0x30] sm:$0xff]
        %v265 = vld [vmem:[%s260 + $0x40] sm:$0xff]
        %v266 = vld [vmem:[%s260 + $0x50] sm:$0xff]
        %v267 = vld [vmem:[%s260 + $0x60] sm:$0xff]
        %v268 = vld [vmem:[%s260 + $0x70] sm:$0xff]
        %v269 = vld [vmem:[%s260 + $0x80] sm:$0xff]
        %v270 = vld [vmem:[%s260 + $0x90] sm:$0xff]
        %v271 = vld [vmem:[%s260 + $0xa0] sm:$0xff]
        %v272 = vld [vmem:[%s260 + $0xb0] sm:$0xff]
        %v273 = vld [vmem:[%s260 + $0xc0] sm:$0xff]
        %v274 = vld [vmem:[%s260 + $0xd0] sm:$0xff]
        %v275 = vld [vmem:[%s260 + $0xe0] sm:$0xff]
        %v276 = vld [vmem:[%s260 + $0xf0] sm:$0xff]
        %v277 = vld [vmem:[#allocation2] sm:$0xff]
        %v278 = vld [vmem:[#allocation2 + $0x8] sm:$0xff]
        %v279 = vld [vmem:[#allocation2 + $0x10] sm:$0xff]
        %v280 = vld [vmem:[#allocation2 + $0x18] sm:$0xff]
        %v281 = vld [vmem:[#allocation2 + $0x20] sm:$0xff]
        %v282 = vld [vmem:[#allocation2 + $0x28] sm:$0xff]
        %v283 = vld [vmem:[#allocation2 + $0x30] sm:$0xff]
        %v284 = vld [vmem:[#allocation2 + $0x38] sm:$0xff]
        %v285 = vld [vmem:[#allocation2 + $0x40] sm:$0xff]
        %v286 = vld [vmem:[#allocation2 + $0x48] sm:$0xff]
        %v287 = vld [vmem:[#allocation2 + $0x50] sm:$0xff]
        %v288 = vld [vmem:[#allocation2 + $0x58] sm:$0xff]
        %v289 = vld [vmem:[#allocation2 + $0x60] sm:$0xff]
        %v290 = vld [vmem:[#allocation2 + $0x68] sm:$0xff]
        %v291 = vld [vmem:[#allocation2 + $0x70] sm:$0xff]
        %v292 = vld [vmem:[#allocation2 + $0x78] sm:$0xff]
        %v293 = vld [vmem:[%s205] sm:$0xf]
        %v294 = vld [vmem:[%s205 + $0x4] sm:$0xf]
        %v295 = vld [vmem:[%s205 + $0x8] sm:$0xf]
        %v296 = vld [vmem:[%s205 + $0xc] sm:$0xf]
        %v297 = vld [vmem:[%s205 + $0x10] sm:$0xf]
        %v298 = vld [vmem:[%s205 + $0x14] sm:$0xf]
        %v299 = vld [vmem:[%s205 + $0x18] sm:$0xf]
        %v300 = vld [vmem:[%s205 + $0x1c] sm:$0xf]
        %v301 = vld [vmem:[%s205 + $0x20] sm:$0xf]
        %v302 = vld [vmem:[%s205 + $0x24] sm:$0xf]
        %v303 = vld [vmem:[%s205 + $0x28] sm:$0xf]
        %v304 = vld [vmem:[%s205 + $0x2c] sm:$0xf]
        %v305 = vld [vmem:[%s205 + $0x30] sm:$0xf]
        %v306 = vld [vmem:[%s205 + $0x34] sm:$0xf]
        %v307 = vld [vmem:[%s205 + $0x38] sm:$0xf]
        %v308 = vld [vmem:[%s205 + $0x3c] sm:$0xf]
        %v309 = vld [vmem:[%s205 + $0x40] sm:$0xf]
        %v310 = vld [vmem:[%s205 + $0x44] sm:$0xf]
        %v311 = vld [vmem:[%s205 + $0x48] sm:$0xf]
        %v312 = vld [vmem:[%s205 + $0x4c] sm:$0xf]
        %v313 = vld [vmem:[%s205 + $0x50] sm:$0xf]
        %v314 = vld [vmem:[%s205 + $0x54] sm:$0xf]
        %v315 = vld [vmem:[%s205 + $0x58] sm:$0xf]
        %v316 = vld [vmem:[%s205 + $0x5c] sm:$0xf]
        %v317 = vld [vmem:[%s205 + $0x60] sm:$0xf]
        %v318 = vld [vmem:[%s205 + $0x64] sm:$0xf]
        %v319 = vld [vmem:[%s205 + $0x68] sm:$0xf]
        %v320 = vld [vmem:[%s205 + $0x6c] sm:$0xf]
        %v321 = vld [vmem:[%s205 + $0x70] sm:$0xf]
        %v322 = vld [vmem:[%s205 + $0x74] sm:$0xf]
        %v323 = vld [vmem:[%s205 + $0x78] sm:$0xf]
        %v324 = vld [vmem:[%s205 + $0x7c] sm:$0xf]
        %v341 = vunpack.c.l.b16 %v261
        %v342 = vunpack.c.h.b16 %v261
        %v343 = vunpack.c.l.b16 %v262
        %v344 = vunpack.c.h.b16 %v262
        %v345 = vunpack.c.l.b16 %v263
        %v346 = vunpack.c.h.b16 %v263
        %v347 = vunpack.c.l.b16 %v264
        %v348 = vunpack.c.h.b16 %v264
        %v349 = vunpack.c.l.b16 %v265
        %v350 = vunpack.c.h.b16 %v265
        %v351 = vunpack.c.l.b16 %v266
        %v352 = vunpack.c.h.b16 %v266
        %v353 = vunpack.c.l.b16 %v267
        %v354 = vunpack.c.h.b16 %v267
        %v355 = vunpack.c.l.b16 %v268
        %v356 = vunpack.c.h.b16 %v268
        %v357 = vunpack.c.l.b16 %v269
        %v358 = vunpack.c.h.b16 %v269
        %v359 = vunpack.c.l.b16 %v270
        %v360 = vunpack.c.h.b16 %v270
        %v361 = vunpack.c.l.b16 %v271
        %v362 = vunpack.c.h.b16 %v271
        %v363 = vunpack.c.l.b16 %v272
        %v364 = vunpack.c.h.b16 %v272
        %v365 = vunpack.c.l.b16 %v273
        %v366 = vunpack.c.h.b16 %v273
        %v367 = vunpack.c.l.b16 %v274
        %v368 = vunpack.c.h.b16 %v274
        %v369 = vunpack.c.l.b16 %v275
        %v370 = vunpack.c.h.b16 %v275
        %v371 = vunpack.c.l.b16 %v276
        %v372 = vunpack.c.h.b16 %v276
        %v373 = vpack.c.b16 %v343, %v341
        %v374 = vpack.c.b16 %v344, %v342
        %v375 = vpack.c.b16 %v347, %v345
        %v376 = vpack.c.b16 %v348, %v346
        %v377 = vpack.c.b16 %v351, %v349
        %v378 = vpack.c.b16 %v352, %v350
        %v379 = vpack.c.b16 %v355, %v353
        %v380 = vpack.c.b16 %v356, %v354
        %v381 = vpack.c.b16 %v359, %v357
        %v382 = vpack.c.b16 %v360, %v358
        %v383 = vpack.c.b16 %v363, %v361
        %v384 = vpack.c.b16 %v364, %v362
        %v385 = vpack.c.b16 %v367, %v365
        %v386 = vpack.c.b16 %v368, %v366
        %v387 = vpack.c.b16 %v371, %v369
        %v388 = vpack.c.b16 %v372, %v370
        %v437 = vunpack.c.l.b16 %v293
        %v438 = vunpack.c.l.b16 %v294
        %v439 = vunpack.c.l.b16 %v295
        %v440 = vunpack.c.l.b16 %v296
        %v441 = vunpack.c.l.b16 %v297
        %v442 = vunpack.c.l.b16 %v298
        %v443 = vunpack.c.l.b16 %v299
        %v444 = vunpack.c.l.b16 %v300
        %v445 = vunpack.c.l.b16 %v301
        %v446 = vunpack.c.l.b16 %v302
        %v447 = vunpack.c.l.b16 %v303
        %v448 = vunpack.c.l.b16 %v304
        %v449 = vunpack.c.l.b16 %v305
        %v450 = vunpack.c.l.b16 %v306
        %v451 = vunpack.c.l.b16 %v307
        %v452 = vunpack.c.l.b16 %v308
        %v453 = vunpack.c.l.b16 %v309
        %v454 = vunpack.c.l.b16 %v310
        %v455 = vunpack.c.l.b16 %v311
        %v456 = vunpack.c.l.b16 %v312
        %v457 = vunpack.c.l.b16 %v313
        %v458 = vunpack.c.l.b16 %v314
        %v459 = vunpack.c.l.b16 %v315
        %v460 = vunpack.c.l.b16 %v316
        %v461 = vunpack.c.l.b16 %v317
        %v462 = vunpack.c.l.b16 %v318
        %v463 = vunpack.c.l.b16 %v319
        %v464 = vunpack.c.l.b16 %v320
        %v465 = vunpack.c.l.b16 %v321
        %v466 = vunpack.c.l.b16 %v322
        %v467 = vunpack.c.l.b16 %v323
        %v468 = vunpack.c.l.b16 %v324
        %v469 = vpack.c.b16 %v438, %v437
        %v470 = vpack.c.b16 %v440, %v439
        %v471 = vpack.c.b16 %v442, %v441
        %v472 = vpack.c.b16 %v444, %v443
        %v473 = vpack.c.b16 %v446, %v445
        %v474 = vpack.c.b16 %v448, %v447
        %v475 = vpack.c.b16 %v450, %v449
        %v476 = vpack.c.b16 %v452, %v451
        %v477 = vpack.c.b16 %v454, %v453
        %v478 = vpack.c.b16 %v456, %v455
        %v479 = vpack.c.b16 %v458, %v457
        %v480 = vpack.c.b16 %v460, %v459
        %v481 = vpack.c.b16 %v462, %v461
        %v482 = vpack.c.b16 %v464, %v463
        %v483 = vpack.c.b16 %v466, %v465
        %v484 = vpack.c.b16 %v468, %v467
        %501 = vmatprep.subr.bf16.mxu0 0
        %502 = vmatpush1.bf16.msra.mxu0 %v469
        %503 = vmatprep.subr.bf16.mxu0 0
        %504 = vmatpush1.bf16.msra.mxu0 %v470
        %505 = vmatprep.subr.bf16.mxu0 0
        %506 = vmatpush1.bf16.msra.mxu0 %v471
        %507 = vmatprep.subr.bf16.mxu0 0
        %508 = vmatpush1.bf16.msra.mxu0 %v472
        %509 = vmatprep.subr.bf16.mxu0 0
        %510 = vmatpush1.bf16.msra.mxu0 %v473
        %511 = vmatprep.subr.bf16.mxu0 0
        %512 = vmatpush1.bf16.msra.mxu0 %v474
        %513 = vmatprep.subr.bf16.mxu0 0
        %514 = vmatpush1.bf16.msra.mxu0 %v475
        %515 = vmatprep.subr.bf16.mxu0 0
        %516 = vmatpush1.bf16.msra.mxu0 %v476
        %517 = vmatprep.subr.bf16.mxu0 0
        %518 = vmatpush1.bf16.msra.mxu0 %v477
        %519 = vmatprep.subr.bf16.mxu0 0
        %520 = vmatpush1.bf16.msra.mxu0 %v478
        %521 = vmatprep.subr.bf16.mxu0 0
        %522 = vmatpush1.bf16.msra.mxu0 %v479
        %523 = vmatprep.subr.bf16.mxu0 0
        %524 = vmatpush1.bf16.msra.mxu0 %v480
        %525 = vmatprep.subr.bf16.mxu0 0
        %526 = vmatpush1.bf16.msra.mxu0 %v481
        %527 = vmatprep.subr.bf16.mxu0 0
        %528 = vmatpush1.bf16.msra.mxu0 %v482
        %529 = vmatprep.subr.bf16.mxu0 0
        %530 = vmatpush1.bf16.msra.mxu0 %v483
        %531 = vmatprep.subr.bf16.mxu0 0
        %532 = vmatpush1.bf16.msra.mxu0 %v484
        %533 = vmatprep.mubr.bf16.mxu0 %v374
        %534 = vmatmul.mubr.bf16.gmra.mrb[0].mxu0 %v373
        %v535 = vpop.f32.mrb[0].mxu0
        %v536 = vadd.f32 0.0, %v535
        %v537 = vpop.f32.mrb[0].mxu0
        %v538 = vpop.f32.mrb[0].mxu0
        %v539 = vadd.f32 0.0, %v538
        %v540 = vpop.f32.mrb[0].mxu0
        %541 = vmatprep.mubr.bf16.mxu0 %v376
        %542 = vmatmul.mubr.bf16.gmra.mrb[0].mxu0 %v375
        %v543 = vpop.f32.mrb[0].mxu0
        %v544 = vadd.f32 0.0, %v543
        %v545 = vpop.f32.mrb[0].mxu0
        %v546 = vpop.f32.mrb[0].mxu0
        %v547 = vadd.f32 0.0, %v546
        %v548 = vpop.f32.mrb[0].mxu0
        %549 = vmatprep.mubr.bf16.mxu0 %v378
        %550 = vmatmul.mubr.bf16.gmra.mrb[0].mxu0 %v377
        %v551 = vpop.f32.mrb[0].mxu0
        %v552 = vadd.f32 0.0, %v551
        %v553 = vpop.f32.mrb[0].mxu0
        %v554 = vpop.f32.mrb[0].mxu0
        %v555 = vadd.f32 0.0, %v554
        %v556 = vpop.f32.mrb[0].mxu0
        %557 = vmatprep.mubr.bf16.mxu0 %v380
        %558 = vmatmul.mubr.bf16.gmra.mrb[0].mxu0 %v379
        %v559 = vpop.f32.mrb[0].mxu0
        %v560 = vadd.f32 0.0, %v559
        %v561 = vpop.f32.mrb[0].mxu0
        %v562 = vpop.f32.mrb[0].mxu0
        %v563 = vadd.f32 0.0, %v562
        %v564 = vpop.f32.mrb[0].mxu0
        %565 = vmatprep.mubr.bf16.mxu0 %v382
        %566 = vmatmul.mubr.bf16.gmra.mrb[0].mxu0 %v381
        %v567 = vpop.f32.mrb[0].mxu0
        %v568 = vadd.f32 0.0, %v567
        %v569 = vpop.f32.mrb[0].mxu0
        %v570 = vpop.f32.mrb[0].mxu0
        %v571 = vadd.f32 0.0, %v570
        %v572 = vpop.f32.mrb[0].mxu0
        %573 = vmatprep.mubr.bf16.mxu0 %v384
        %574 = vmatmul.mubr.bf16.gmra.mrb[0].mxu0 %v383
        %v575 = vpop.f32.mrb[0].mxu0
        %v576 = vadd.f32 0.0, %v575
        %v577 = vpop.f32.mrb[0].mxu0
        %v578 = vpop.f32.mrb[0].mxu0
        %v579 = vadd.f32 0.0, %v578
        %v580 = vpop.f32.mrb[0].mxu0
        %581 = vmatprep.mubr.bf16.mxu0 %v386
        %582 = vmatmul.mubr.bf16.gmra.mrb[0].mxu0 %v385
        %v583 = vpop.f32.mrb[0].mxu0
        %v584 = vadd.f32 0.0, %v583
        %v585 = vpop.f32.mrb[0].mxu0
        %v586 = vpop.f32.mrb[0].mxu0
        %v587 = vadd.f32 0.0, %v586
        %v588 = vpop.f32.mrb[0].mxu0
        %589 = vmatprep.mubr.bf16.mxu0 %v388
        %590 = vmatmul.mubr.bf16.gmra.mrb[0].mxu0 %v387
        %v591 = vpop.f32.mrb[0].mxu0
        %v592 = vadd.f32 0.0, %v591
        %v593 = vpop.f32.mrb[0].mxu0
        %v594 = vpop.f32.mrb[0].mxu0
        %v595 = vadd.f32 0.0, %v594
        %v596 = vpop.f32.mrb[0].mxu0
        %597 = vdwg.mxu0
        %v598 = vadd.f32 %v277, %v536
        %v599 = vadd.f32 %v278, %v539
        %v600 = vadd.f32 %v279, %v544
        %v601 = vadd.f32 %v280, %v547
        %v602 = vadd.f32 %v281, %v552
        %v603 = vadd.f32 %v282, %v555
        %v604 = vadd.f32 %v283, %v560
        %v605 = vadd.f32 %v284, %v563
        %v606 = vadd.f32 %v285, %v568
        %v607 = vadd.f32 %v286, %v571
        %v608 = vadd.f32 %v287, %v576
        %v609 = vadd.f32 %v288, %v579
        %v610 = vadd.f32 %v289, %v584
        %v611 = vadd.f32 %v290, %v587
        %v612 = vadd.f32 %v291, %v592
        %v613 = vadd.f32 %v292, %v595
        %614 = vst [vmem:[#allocation2] sm:$0xff] %v598
        %615 = vst [vmem:[#allocation2 + $0x8] sm:$0xff] %v599
        %616 = vst [vmem:[#allocation2 + $0x10] sm:$0xff] %v600
        %617 = vst [vmem:[#allocation2 + $0x18] sm:$0xff] %v601
        %618 = vst [vmem:[#allocation2 + $0x20] sm:$0xff] %v602
        %619 = vst [vmem:[#allocation2 + $0x28] sm:$0xff] %v603
        %620 = vst [vmem:[#allocation2 + $0x30] sm:$0xff] %v604
        %621 = vst [vmem:[#allocation2 + $0x38] sm:$0xff] %v605
        %622 = vst [vmem:[#allocation2 + $0x40] sm:$0xff] %v606
        %623 = vst [vmem:[#allocation2 + $0x48] sm:$0xff] %v607
        %624 = vst [vmem:[#allocation2 + $0x50] sm:$0xff] %v608
        %625 = vst [vmem:[#allocation2 + $0x58] sm:$0xff] %v609
        %626 = vst [vmem:[#allocation2 + $0x60] sm:$0xff] %v610
        %627 = vst [vmem:[#allocation2 + $0x68] sm:$0xff] %v611
        %628 = vst [vmem:[#allocation2 + $0x70] sm:$0xff] %v612
        %629 = vst [vmem:[#allocation2 + $0x78] sm:$0xff] %v613
        %p630 = scmp.eq.s32.totalorder %s26, 1
        // Predicated region
        $region45: #{tpu_custom_call.1} parent=31 // pred_check
          %p631 = pneg %p630
        $region46: #{tpu_custom_call.1} parent=31 // pred_check_branch
          %633 = sbr.rel (%p631) target = $region48
        $region47: #{tpu_custom_call.1} parent=31 // pred_region
          %v634 = vld [vmem:[#allocation2] sm:$0xff]
          %v635 = vld [vmem:[#allocation2 + $0x8] sm:$0xff]
          %v636 = vld [vmem:[#allocation2 + $0x10] sm:$0xff]
          %v637 = vld [vmem:[#allocation2 + $0x18] sm:$0xff]
          %v638 = vld [vmem:[#allocation2 + $0x20] sm:$0xff]
          %v639 = vld [vmem:[#allocation2 + $0x28] sm:$0xff]
          %v640 = vld [vmem:[#allocation2 + $0x30] sm:$0xff]
          %v641 = vld [vmem:[#allocation2 + $0x38] sm:$0xff]
          %v642 = vld [vmem:[#allocation2 + $0x40] sm:$0xff]
          %v643 = vld [vmem:[#allocation2 + $0x48] sm:$0xff]
          %v644 = vld [vmem:[#allocation2 + $0x50] sm:$0xff]
          %v645 = vld [vmem:[#allocation2 + $0x58] sm:$0xff]
          %v646 = vld [vmem:[#allocation2 + $0x60] sm:$0xff]
          %v647 = vld [vmem:[#allocation2 + $0x68] sm:$0xff]
          %v648 = vld [vmem:[#allocation2 + $0x70] sm:$0xff]
          %v649 = vld [vmem:[#allocation2 + $0x78] sm:$0xff]
          %v650 = vld [vmem:[%s234] sm:$0x1]
          %v652 = vlaneseq
          %v653 = vshrl.u32 %v652, 7
          %v654 = vsub.s32 0, %v653
          %v655 = vrot.slane %v650, %v654
          %v657 = vmul.f32 %v634, %v655
          %v658 = vmul.f32 %v635, %v655
          %v659 = vmul.f32 %v636, %v655
          %v660 = vmul.f32 %v637, %v655
          %v661 = vmul.f32 %v638, %v655
          %v662 = vmul.f32 %v639, %v655
          %v663 = vmul.f32 %v640, %v655
          %v664 = vmul.f32 %v641, %v655
          %v665 = vmul.f32 %v642, %v655
          %v666 = vmul.f32 %v643, %v655
          %v667 = vmul.f32 %v644, %v655
          %v668 = vmul.f32 %v645, %v655
          %v669 = vmul.f32 %v646, %v655
          %v670 = vmul.f32 %v647, %v655
          %v671 = vmul.f32 %v648, %v655
          %v672 = vmul.f32 %v649, %v655
          %v673 = vpack.c.bf16 %v658, %v657
          %v674 = vpack.c.bf16 %v660, %v659
          %v675 = vpack.c.bf16 %v662, %v661
          %v676 = vpack.c.bf16 %v664, %v663
          %v677 = vpack.c.bf16 %v666, %v665
          %v678 = vpack.c.bf16 %v668, %v667
          %v679 = vpack.c.bf16 %v670, %v669
          %v680 = vpack.c.bf16 %v672, %v671
          %v689 = vunpack.c.l.b16 %v673
          %v690 = vunpack.c.h.b16 %v673
          %v691 = vunpack.c.l.b16 %v674
          %v692 = vunpack.c.h.b16 %v674
          %v693 = vunpack.c.l.b16 %v675
          %v694 = vunpack.c.h.b16 %v675
          %v695 = vunpack.c.l.b16 %v676
          %v696 = vunpack.c.h.b16 %v676
          %v697 = vunpack.c.l.b16 %v677
          %v698 = vunpack.c.h.b16 %v677
          %v699 = vunpack.c.l.b16 %v678
          %v700 = vunpack.c.h.b16 %v678
          %v701 = vunpack.c.l.b16 %v679
          %v702 = vunpack.c.h.b16 %v679
          %v703 = vunpack.c.l.b16 %v680
          %v704 = vunpack.c.h.b16 %v680
          %v705 = vpack.c.b16 %v689, %v689
          %v706 = vpack.c.b16 %v690, %v690
          %v707 = vpack.c.b16 %v691, %v691
          %v708 = vpack.c.b16 %v692, %v692
          %v709 = vpack.c.b16 %v693, %v693
          %v710 = vpack.c.b16 %v694, %v694
          %v711 = vpack.c.b16 %v695, %v695
          %v712 = vpack.c.b16 %v696, %v696
          %v713 = vpack.c.b16 %v697, %v697
          %v714 = vpack.c.b16 %v698, %v698
          %v715 = vpack.c.b16 %v699, %v699
          %v716 = vpack.c.b16 %v700, %v700
          %v717 = vpack.c.b16 %v701, %v701
          %v718 = vpack.c.b16 %v702, %v702
          %v719 = vpack.c.b16 %v703, %v703
          %v720 = vpack.c.b16 %v704, %v704
          %737 = vst [vmem:[%s230] sm:$0xf] %v705
          %738 = vst [vmem:[%s230 + $0x4] sm:$0xf] %v706
          %739 = vst [vmem:[%s230 + $0x8] sm:$0xf] %v707
          %740 = vst [vmem:[%s230 + $0xc] sm:$0xf] %v708
          %741 = vst [vmem:[%s230 + $0x10] sm:$0xf] %v709
          %742 = vst [vmem:[%s230 + $0x14] sm:$0xf] %v710
          %743 = vst [vmem:[%s230 + $0x18] sm:$0xf] %v711
          %744 = vst [vmem:[%s230 + $0x1c] sm:$0xf] %v712
          %745 = vst [vmem:[%s230 + $0x20] sm:$0xf] %v713
          %746 = vst [vmem:[%s230 + $0x24] sm:$0xf] %v714
          %747 = vst [vmem:[%s230 + $0x28] sm:$0xf] %v715
          %748 = vst [vmem:[%s230 + $0x2c] sm:$0xf] %v716
          %749 = vst [vmem:[%s230 + $0x30] sm:$0xf] %v717
          %750 = vst [vmem:[%s230 + $0x34] sm:$0xf] %v718
          %751 = vst [vmem:[%s230 + $0x38] sm:$0xf] %v719
          %752 = vst [vmem:[%s230 + $0x3c] sm:$0xf] %v720
        $region48: #{tpu_custom_call.1} parent=31 // pred_fallthru
          _
        %s753 = sand.u32 %s116, 1
        %s754 = scalar_lea.sflag [#allocation5], %s753
        %s755 = sand.u32 %s116, 1
        %s756 = smul.addr %s755, 64
        %s757 = scalar_lea.vmem [#allocation8], %s756
        // Predicated region
        $region49: #{tpu_custom_call.1} parent=31 // pred_check
          %p758 = pneg %p126
        $region50: #{tpu_custom_call.1} parent=31 // pred_check_branch
          %760 = sbr.rel (%p758) target = $region52
        $region51: #{tpu_custom_call.1} parent=31 // pred_region
          %s762 = ssub.s32 1024, 1024
          %763 = vsyncadd %s754, %s762
          %s764 = smul.addr %s25, 64
          %s765 = scalar_lea.hbm %s3, %s764
          %s766 = sshll.u32 %s757, 4
          %s767 = int_to_ptr.vmem [resolvable:$true] %s766
          %772 = dma.vmem_to_hbm [thread:$0]  %s767, 1024, %s765, %s754, 64, 128, 4
        $region52: #{tpu_custom_call.1} parent=31 // pred_fallthru
          _
      $region32: #{tpu_custom_call.1} parent=5 // pred_fallthru
        _
      %p773 = scmp.le.s32.totalorder 2, %s16
      // Predicated region
      $region53: #{tpu_custom_call.1} parent=5 // pred_check
        %p774 = pneg %p773
      $region54: #{tpu_custom_call.1} parent=5 // pred_check_branch
        %776 = sbr.rel (%p774) target = $region56
      $region55: #{tpu_custom_call.1} parent=5 // pred_region
        %s777 = ssub.s32 %s16, 2
        // Predicated region
        $region57: #{tpu_custom_call.1} parent=55 // pred_check
          %p778 = pneg %p132
        $region58: #{tpu_custom_call.1} parent=55 // pred_check_branch
          %780 = sbr.rel (%p778) target = $region60
        $region59: #{tpu_custom_call.1} parent=55 // pred_region
          %s781 = sand.u32 %s117, 1
          %s782 = scalar_lea.sflag [#allocation5], %s781
          %s783 = sand.u32 %s117, 1
          %s784 = smul.addr %s783, 64
          %s785 = scalar_lea.vmem [#allocation8], %s784
          %786 = dma.done %s782, 1024
        $region60: #{tpu_custom_call.1} parent=55 // pred_fallthru
          _
      $region56: #{tpu_custom_call.1} parent=5 // pred_fallthru
        _
    $region6: #{tpu_custom_call.1} parent=1 // loop_footer
      %s20 = sadd.s32 1, %s16
    $region7: #{tpu_custom_call.1} parent=1 // loop_footer_branch
      %15 = sbr.rel target = $region3
    $region8: #{tpu_custom_call.1} parent=1 // loop_exit
      _
    %787 = vsyncpa [#allocation4], 1
    %s788 = scalar_lea.sflag [#allocation4], 1
    %789 = vsyncpa %s788, 1
    %790 = vsyncpa [#allocation7], 1
    %s791 = scalar_lea.sflag [#allocation7], 1
    %792 = vsyncpa %s791, 1
    %793 = vsyncpa [#allocation5], 1
    %s794 = scalar_lea.sflag [#allocation5], 1
    %795 = vsyncpa %s794, 1

</llo_original>
